<compile_context>
chip_gen: v6e
topology: v6e:2x2x1
jax: 0.10.0
libtpu: 0.0.40
codegen_flags: <defaults>
</compile_context>

<pallas_src>
import functools

import jax
import jax.numpy as jnp
from jax.experimental import pallas as pl
from jax.experimental.pallas import tpu as pltpu


def show_attend_tell_kernel(
    # inputs (everything except xt has a constant index_map -> fetched once,
    # VMEM-resident for the whole decode)
    xt_ref,        # (B, E)          token embedding for step t (streamed)
    clip_ref,      # (B, S, C)       clip attention features
    mask_ref,      # (B, S)          float attention mask
    state_in_ref,  # (B, 4R)         initial state slab [h0|h1|c0|c1]
    w0_ref,        # (E+C+R, 4R)     stacked layer-0 weights [W_x; W_att; W_h]
    w1_ref,        # (2R, 4R)        stacked layer-1 weights [W_x; W_h]
    ctxw_ref,      # (C, H)          ctx2att weight
    h2aw_ref,      # (R, H)          h2att weight
    small_ref,     # (8, >=max(4R,H)) packed small params (see wrapper)
    # outputs
    out_ref,       # (B, 4R)         running state slab (grid-resident;
                   #                 aliased onto state_in in HBM)
    # scratch
    attproj_scr,   # (B, S, H) f32   loop-invariant clip->att projection
):
    t = pl.program_id(0)
    B, E = xt_ref.shape
    _, S, C = clip_ref.shape
    R4 = out_ref.shape[1]
    R = R4 // 4
    H = ctxw_ref.shape[1]
    mxu_dtype = w0_ref.dtype

    clip = clip_ref[...]

    @pl.when(t == 0)
    def _init():
        # Seed the resident state slab from the caller-provided state.
        out_ref[...] = state_in_ref[...]
        # Hoisted, decode-loop-invariant clip -> attention projection.
        # (B,S,C)<->(B*S,C): S == 8 sublanes, so the leading-dim merge/split
        # never crosses an (8,128) tile.
        att = jnp.dot(clip.reshape(B * S, C).astype(mxu_dtype), ctxw_ref[...],
                      preferred_element_type=jnp.float32)          # (B*S, H)
        attproj_scr[...] = att.reshape(B, S, H)

    b0_video = small_ref[0:1, 0:R4]   # (1, 4R) video stream folded into gate bias
    att_bias = small_ref[1:2, 0:H]    # (1, H)  ctx2att_b + h2att_b
    alpha_w = small_ref[2:3, 0:H]     # (1, H)  alpha_net weight

    state = out_ref[...]
    h0_prev = state[:, 0 * R:1 * R]
    h1_prev = state[:, 1 * R:2 * R]
    c0_prev = state[:, 2 * R:3 * R]
    c1_prev = state[:, 3 * R:4 * R]

    # ---- additive attention over clip slots, query = last-layer hidden ----
    att_h = jnp.dot(h1_prev.astype(mxu_dtype), h2aw_ref[...],
                    preferred_element_type=jnp.float32)            # (B, H)
    dot3 = jnp.tanh(attproj_scr[...] + (att_h + att_bias)[:, None, :])
    alpha = jnp.sum(dot3 * alpha_w, axis=2)                        # (B, S)
    # softmax -> mask -> renormalize fused into one masked normalization.
    # (alpha_net bias dropped: constant logit shift is softmax-invariant.)
    alpha = alpha - jnp.max(alpha, axis=1, keepdims=True)
    w = jnp.exp(alpha) * mask_ref[...]
    w = w * pl.reciprocal(jnp.sum(w, axis=1, keepdims=True), approx=True)
    att_res = jnp.sum(w[:, :, None] * clip, axis=1)                # (B, C)

    # ---- layer-0 LSTM cell: input = [xt | video | att_res] (video in b0_video)
    # Register-level concat (XLU) feeding one fused K=E+C+R, N=4R MXU push;
    # no VMEM scratch round-trip.
    x0 = jnp.concatenate([xt_ref[...], att_res, h0_prev], axis=1).astype(mxu_dtype)
    gates0 = jnp.dot(x0, w0_ref[...],
                     preferred_element_type=jnp.float32) + b0_video
    # Full-width nonlinearities over the whole (B,4R) tile, then lane-slice.
    # PyTorch LSTM gate order: i, f, g, o.
    sig0 = jax.nn.sigmoid(gates0)
    tah0 = jnp.tanh(gates0)
    c0_new = sig0[:, 1 * R:2 * R] * c0_prev + sig0[:, 0:R] * tah0[:, 2 * R:3 * R]
    h0_new = sig0[:, 3 * R:4 * R] * jnp.tanh(c0_new)

    # ---- layer-1 LSTM cell (inter-layer dropout = identity in eval mode)
    x1 = jnp.concatenate([h0_new, h1_prev], axis=1).astype(mxu_dtype)
    gates1 = jnp.dot(x1, w1_ref[...], preferred_element_type=jnp.float32)
    sig1 = jax.nn.sigmoid(gates1)
    tah1 = jnp.tanh(gates1)
    c1_new = sig1[:, 1 * R:2 * R] * c1_prev + sig1[:, 0:R] * tah1[:, 2 * R:3 * R]
    h1_new = sig1[:, 3 * R:4 * R] * jnp.tanh(c1_new)

    # ---- single unmasked lane-dense (4R = 128) store of the new state slab
    out_ref[...] = jnp.concatenate([h0_new, h1_new, c0_new, c1_new], axis=1)


def _pallas_decode(xt_seq, clip, clip_mask, state_slab, kp):
    """Runs T decode steps inside one pallas_call (grid over T)."""
    T, B, E = xt_seq.shape
    _, S, C = clip.shape
    R4 = state_slab.shape[1]
    H = kp["ctxw"].shape[1]

    grid_spec = pltpu.PrefetchScalarGridSpec(
        num_scalar_prefetch=0,
        grid=(T,),
        in_specs=[
            pl.BlockSpec((None, B, E), lambda t: (t, 0, 0)),       # xt streamed
            pl.BlockSpec((B, S, C), lambda t: (0, 0, 0)),          # resident
            pl.BlockSpec((B, S), lambda t: (0, 0)),                # resident
            pl.BlockSpec((B, R4), lambda t: (0, 0)),               # init state
            pl.BlockSpec(kp["w0"].shape, lambda t: (0, 0)),        # resident
            pl.BlockSpec(kp["w1"].shape, lambda t: (0, 0)),        # resident
            pl.BlockSpec(kp["ctxw"].shape, lambda t: (0, 0)),      # resident
            pl.BlockSpec(kp["h2aw"].shape, lambda t: (0, 0)),      # resident
            pl.BlockSpec(kp["small"].shape, lambda t: (0, 0)),     # resident
        ],
        out_specs=pl.BlockSpec((B, R4), lambda t: (0, 0)),         # state carry
        scratch_shapes=[pltpu.VMEM((B, S, H), jnp.float32)],
    )
    fn = pl.pallas_call(
        show_attend_tell_kernel,
        out_shape=jax.ShapeDtypeStruct((B, R4), jnp.float32),
        grid_spec=grid_spec,
        input_output_aliases={3: 0},   # new state slab overwrites the old in place
        compiler_params=pltpu.CompilerParams(
            dimension_semantics=("arbitrary",)),                   # sequential carry
    )
    return fn(xt_seq, clip, clip_mask.astype(jnp.float32), state_slab,
              kp["w0"], kp["w1"], kp["ctxw"], kp["h2aw"], kp["small"])


def prepare_kernel_params(params, video, E, V, dtype=jnp.bfloat16):
    """Parameter stacking / folding (hoist out of the decode loop in real use).
    MXU operands are stored in `dtype` (bf16 by default); accumulation and all
    nonlinear math stay f32 in-kernel."""
    w_ih0 = params["w_ih_l0"]                          # (4R, E+V+C)
    R4 = w_ih0.shape[0]
    H = params["h2att_w"].shape[0]
    # fused layer-0 weights, ordered to match in-kernel [xt | att_res | h0_prev]
    w0 = jnp.concatenate([
        w_ih0[:, :E].T,                                # xt part       (E, 4R)
        w_ih0[:, E + V:].T,                            # att_res part  (C, 4R)
        params["w_hh_l0"].T,                           # h0 part       (R, 4R)
    ], axis=0).astype(dtype)
    # fused layer-1 weights, ordered to match [h0_new | h1_prev]
    w1 = jnp.concatenate([params["w_ih_l1"].T,
                          params["w_hh_l1"].T], axis=0).astype(dtype)
    ctxw = params["ctx2att_w"].T.astype(dtype)         # (C, H)
    h2aw = params["h2att_w"].T.astype(dtype)           # (R, H)
    # constant video stream folded into a gate "bias" row (kept f32)
    b0_video = video @ w_ih0[:, E:E + V].T             # (4R,)
    width = max(R4, H)
    small = jnp.zeros((8, width), jnp.float32)
    small = small.at[0, :R4].set(b0_video)
    small = small.at[1, :H].set(params["ctx2att_b"] + params["h2att_b"])
    small = small.at[2, :H].set(params["alpha_w"][0])
    # alpha_net bias intentionally dropped (softmax-shift invariant)
    return {"w0": w0, "w1": w1, "ctxw": ctxw, "h2aw": h2aw, "small": small}


def pack_state(state):
    h, c = state                                       # each (2, B, R)
    return jnp.concatenate([h[0], h[1], c[0], c[1]], axis=1)      # (B, 4R)


def unpack_state(slab, R):
    h = jnp.stack([slab[:, 0:R], slab[:, R:2 * R]])
    c = jnp.stack([slab[:, 2 * R:3 * R], slab[:, 3 * R:4 * R]])
    output = slab[:, R:2 * R]                          # last-layer hidden
    return output, (h, c)


def show_attend_tell_core(xt, video, clip, clip_mask, state, params,
                          dtype=jnp.bfloat16):
    """The module's forward: one decode step (T=1 grid)."""
    h_state, _ = state
    assert h_state.shape[0] == 2, "kernel is specialized to CG_num_layers == 2"
    R = h_state.shape[2]
    E = xt.shape[1]
    V = video.shape[0]
    kp = prepare_kernel_params(params, video, E, V, dtype=dtype)
    slab = pack_state(state)
    new_slab = _pallas_decode(xt[None], clip, clip_mask, slab, kp)
    return unpack_state(new_slab, R)


def show_attend_tell_decode(xt_seq, video, clip, clip_mask, state, params,
                            dtype=jnp.bfloat16):
    """T-step decode with the loop inside the kernel (weights, clip features
    and the running state stay VMEM-resident; only xt streams per step)."""
    h_state, _ = state
    assert h_state.shape[0] == 2
    R = h_state.shape[2]
    E = xt_seq.shape[2]
    V = video.shape[0]
    kp = prepare_kernel_params(params, video, E, V, dtype=dtype)   # hoisted
    slab = pack_state(state)
    new_slab = _pallas_decode(xt_seq, clip, clip_mask, slab, kp)
    return unpack_state(new_slab, R)


# ---------------- pure-JAX reference (mirrors the PyTorch forward) ----------------
def reference(xt, video, clip, clip_mask, state, params):
    h_state, c_state = state
    B, E = xt.shape
    _, S, C = clip.shape
    H = params["h2att_w"].shape[0]

    pre_h = h_state[-1]                                # state[0][-1]
    att = clip.reshape(-1, C) @ params["ctx2att_w"].T + params["ctx2att_b"]
    att = att.reshape(B, S, H)
    att_h = pre_h @ params["h2att_w"].T + params["h2att_b"]
    dot = jnp.tanh(att + att_h[:, None, :])
    dot = dot.reshape(B * S, H) @ params["alpha_w"].T + params["alpha_b"]
    dot = dot.reshape(B, S)
    weight = jax.nn.softmax(dot, axis=1)
    weight = weight * clip_mask
    weight = weight / weight.sum(1, keepdims=True)
    att_res = jnp.einsum("bs,bsc->bc", weight, clip)

    video_exp = jnp.broadcast_to(video[None, :], (B, video.shape[0]))
    rnn_in = jnp.concatenate([xt, video_exp, att_res], axis=1)

    def cell(x, h, c, w_ih, w_hh):                     # nn.LSTM, bias=False
        gates = x @ w_ih.T + h @ w_hh.T
        i, f, g, o = jnp.split(gates, 4, axis=1)
        c_new = jax.nn.sigmoid(f) * c + jax.nn.sigmoid(i) * jnp.tanh(g)
        h_new = jax.nn.sigmoid(o) * jnp.tanh(c_new)
        return h_new, c_new

    h0, c0 = cell(rnn_in, h_state[0], c_state[0],
                  params["w_ih_l0"], params["w_hh_l0"])
    # inter-layer dropout is identity in eval mode
    h1, c1 = cell(h0, h_state[1], c_state[1],
                  params["w_ih_l1"], params["w_hh_l1"])
    return h1, (jnp.stack([h0, h1]), jnp.stack([c0, c1]))


def init_params(key, E, V, C, R, H):
    keys = jax.random.split(key, 10)

    def w(k, shape, scale=0.08):
        return scale * jax.random.normal(k, shape, dtype=jnp.float32)

    return {
        # nn.LSTM(E + V + C, R, num_layers=2, bias=False)
        "w_ih_l0": w(keys[0], (4 * R, E + V + C)),
        "w_hh_l0": w(keys[1], (4 * R, R)),
        "w_ih_l1": w(keys[2], (4 * R, R)),
        "w_hh_l1": w(keys[3], (4 * R, R)),
        # attention
        "ctx2att_w": w(keys[4], (H, C)),
        "ctx2att_b": w(keys[5], (H,)),
        "h2att_w": w(keys[6], (H, R)),
        "h2att_b": w(keys[7], (H,)),
        "alpha_w": w(keys[8], (1, H)),
        "alpha_b": w(keys[9], (1,)),
    }


if __name__ == "__main__":
    B = 2     # batch
    E = 32    # CG_input_encoding_size
    R = 32    # CG_rnn_size
    H = 32    # CG_att_hid_size
    V = 32    # video_context_dim  ('V' in CG_input_feats_type)
    C = 32    # clip_context_dim   ('C' in CG_input_feats_type)
    S = 8     # attention slots per sample
    L = 2     # CG_num_layers

    key = jax.random.PRNGKey(0)
    k_xt, k_vid, k_clip, k_h, k_c, k_p, k_seq = jax.random.split(key, 7)

    xt = jax.random.normal(k_xt, (B, E), dtype=jnp.float32)
    video = jax.random.normal(k_vid, (V,), dtype=jnp.float32)
    clip = jax.random.normal(k_clip, (B, S, C), dtype=jnp.float32)
    lengths = jnp.array([6, 8], dtype=jnp.int32)
    clip_mask = (jnp.arange(S)[None, :] < lengths[:, None]).astype(jnp.float32)
    h_state = 0.1 * jax.random.normal(k_h, (L, B, R), dtype=jnp.float32)
    c_state = 0.1 * jax.random.normal(k_c, (L, B, R), dtype=jnp.float32)
    state0 = (h_state, c_state)
    params = init_params(k_p, E, V, C, R, H)

    # ---- check 1: single-step module forward, f32 MXU operands (tight parity) ----
    run_f32 = jax.jit(functools.partial(show_attend_tell_core, dtype=jnp.float32))
    out_k, (h_k, c_k) = run_f32(xt, video, clip, clip_mask, state0, params)
    jax.block_until_ready((out_k, h_k, c_k))
    out_r, (h_r, c_r) = reference(xt, video, clip, clip_mask, state0, params)
    for a, b in [(out_k, out_r), (h_k, h_r), (c_k, c_r)]:
        assert a.shape == b.shape, (a.shape, b.shape)
        err = float(jnp.max(jnp.abs(a - b)))
        assert err < 2e-3, f"f32 single-step error {err}"

    # ---- check 2: T-step in-kernel decode, bf16 MXU operands / f32 math ----
    T = 4
    xt_seq = jax.random.normal(k_seq, (T, B, E), dtype=jnp.float32)
    run_dec = jax.jit(show_attend_tell_decode)          # default dtype=bf16
    out_kT, (h_kT, c_kT) = run_dec(xt_seq, video, clip, clip_mask, state0, params)
    jax.block_until_ready((out_kT, h_kT, c_kT))
    st = state0
    out_rT = None
    for t in range(T):
        out_rT, st = reference(xt_seq[t], video, clip, clip_mask, st, params)
    h_rT, c_rT = st
    for a, b in [(out_kT, out_rT), (h_kT, h_rT), (c_kT, c_rT)]:
        assert a.shape == b.shape, (a.shape, b.shape)
        err = float(jnp.max(jnp.abs(a - b)))
        assert err < 3e-2, f"bf16 multi-step error {err}"

    print("KERNEL_OK")
</pallas_src>

<mosaic_0001>
module attributes {stable_mosaic.version = 11 : i64} {
  func.func @show_attend_tell_kernel(%arg0: i32, %arg1: memref<1x2x32xf32, #tpu.memory_space<vmem>>, %arg2: memref<2x8x32xf32, #tpu.memory_space<vmem>>, %arg3: memref<2x8xf32, #tpu.memory_space<vmem>>, %arg4: memref<2x128xf32, #tpu.memory_space<vmem>>, %arg5: memref<96x128xf32, #tpu.memory_space<vmem>>, %arg6: memref<64x128xf32, #tpu.memory_space<vmem>>, %arg7: memref<32x32xf32, #tpu.memory_space<vmem>>, %arg8: memref<32x32xf32, #tpu.memory_space<vmem>>, %arg9: memref<8x128xf32, #tpu.memory_space<vmem>>, %arg10: memref<2x128xf32, #tpu.memory_space<vmem>>, %arg11: memref<2x8x32xf32, #tpu.memory_space<vmem>>) attributes {dimension_semantics = [#tpu.dimension_semantics<arbitrary>], iteration_bounds = array<i64: 1>, scalar_prefetch = 0 : i64, scratch_operands = 1 : i64, tpu.core_type = #tpu.core_type<tc>, window_params = [{transform_indices = @transform_0, window_bounds = array<i64: 1, 2, 32>}, {pipeline_mode = #tpu.pipeline_mode<synchronous>, transform_indices = @transform_1, window_bounds = array<i64: 2, 8, 32>}, {pipeline_mode = #tpu.pipeline_mode<synchronous>, transform_indices = @transform_2, window_bounds = array<i64: 2, 8>}, {pipeline_mode = #tpu.pipeline_mode<synchronous>, transform_indices = @transform_3, window_bounds = array<i64: 2, 128>}, {pipeline_mode = #tpu.pipeline_mode<synchronous>, transform_indices = @transform_4, window_bounds = array<i64: 96, 128>}, {pipeline_mode = #tpu.pipeline_mode<synchronous>, transform_indices = @transform_5, window_bounds = array<i64: 64, 128>}, {pipeline_mode = #tpu.pipeline_mode<synchronous>, transform_indices = @transform_6, window_bounds = array<i64: 32, 32>}, {pipeline_mode = #tpu.pipeline_mode<synchronous>, transform_indices = @transform_7, window_bounds = array<i64: 32, 32>}, {pipeline_mode = #tpu.pipeline_mode<synchronous>, transform_indices = @transform_8, window_bounds = array<i64: 8, 128>}, {pipeline_mode = #tpu.pipeline_mode<synchronous>, transform_indices = @transform_9, window_bounds = array<i64: 2, 128>}]} {
    %c0 = arith.constant 0 : index
    %c0_0 = arith.constant 0 : index
    %c0_1 = arith.constant 0 : index
    %0 = vector.load %arg2[%c0, %c0_0, %c0_1] : memref<2x8x32xf32, #tpu.memory_space<vmem>>, vector<2x8x32xf32>
    %c0_i32 = arith.constant 0 : i32
    %1 = arith.cmpi eq, %arg0, %c0_i32 : i32
    %2 = arith.extui %1 : i1 to i32
    %c0_i32_2 = arith.constant 0 : i32
    %3 = arith.cmpi ne, %2, %c0_i32_2 : i32
    scf.if %3 {
      %c0_33 = arith.constant 0 : index
      %c0_34 = arith.constant 0 : index
      %83 = vector.load %arg4[%c0_33, %c0_34] : memref<2x128xf32, #tpu.memory_space<vmem>>, vector<2x128xf32>
      %c0_35 = arith.constant 0 : index
      %c0_36 = arith.constant 0 : index
      %84 = vector.load %arg10[%c0_35, %c0_36] : memref<2x128xf32, #tpu.memory_space<vmem>>, vector<2x128xf32>
      tpu.vector_store %arg10[%c0_35, %c0_36], %83 {strides = array<i32>} : memref<2x128xf32, #tpu.memory_space<vmem>>, vector<2x128xf32>,
      %85 = vector.shape_cast %0 : vector<2x8x32xf32> to vector<16x32xf32>
      %c0_37 = arith.constant 0 : index
      %c0_38 = arith.constant 0 : index
      %86 = vector.load %arg7[%c0_37, %c0_38] : memref<32x32xf32, #tpu.memory_space<vmem>>, vector<32x32xf32>
      %cst_39 = arith.constant dense<0.000000e+00> : vector<16x32xf32>
      %87 = tpu.matmul %85, %86, %cst_39 {dimension_numbers = #tpu.dot_dimension_numbers<[1], [0], [0], [1], [0, 0, 1, 1], [], []>} : vector<16x32xf32>, vector<32x32xf32>, vector<16x32xf32> -> vector<16x32xf32>
      %88 = vector.shape_cast %87 : vector<16x32xf32> to vector<2x8x32xf32>
      %c0_40 = arith.constant 0 : index
      %c0_41 = arith.constant 0 : index
      %c0_42 = arith.constant 0 : index
      %89 = vector.load %arg11[%c0_40, %c0_41, %c0_42] : memref<2x8x32xf32, #tpu.memory_space<vmem>>, vector<2x8x32xf32>
      tpu.vector_store %arg11[%c0_40, %c0_41, %c0_42], %88 {strides = array<i32>} : memref<2x8x32xf32, #tpu.memory_space<vmem>>, vector<2x8x32xf32>,
    } else {
    }
    %c0_3 = arith.constant 0 : index
    %c0_4 = arith.constant 0 : index
    %4 = vector.load %arg9[%c0_3, %c0_4] : memref<8x128xf32, #tpu.memory_space<vmem>>, vector<1x128xf32>
    %c1 = arith.constant 1 : index
    %c0_5 = arith.constant 0 : index
    %5 = vector.load %arg9[%c1, %c0_5] : memref<8x128xf32, #tpu.memory_space<vmem>>, vector<1x32xf32>
    %c2 = arith.constant 2 : index
    %c0_6 = arith.constant 0 : index
    %6 = vector.load %arg9[%c2, %c0_6] : memref<8x128xf32, #tpu.memory_space<vmem>>, vector<1x32xf32>
    %c0_7 = arith.constant 0 : index
    %c0_8 = arith.constant 0 : index
    %7 = vector.load %arg10[%c0_7, %c0_8] : memref<2x128xf32, #tpu.memory_space<vmem>>, vector<2x128xf32>
    %8 = vector.extract_strided_slice %7 {offsets = [0, 0], sizes = [2, 32], strides = [1, 1]} : vector<2x128xf32> to vector<2x32xf32>
    %9 = vector.extract_strided_slice %7 {offsets = [0, 32], sizes = [2, 32], strides = [1, 1]} : vector<2x128xf32> to vector<2x32xf32>
    %10 = vector.extract_strided_slice %7 {offsets = [0, 64], sizes = [2, 32], strides = [1, 1]} : vector<2x128xf32> to vector<2x32xf32>
    %11 = vector.extract_strided_slice %7 {offsets = [0, 96], sizes = [2, 32], strides = [1, 1]} : vector<2x128xf32> to vector<2x32xf32>
    %c0_9 = arith.constant 0 : index
    %c0_10 = arith.constant 0 : index
    %12 = vector.load %arg8[%c0_9, %c0_10] : memref<32x32xf32, #tpu.memory_space<vmem>>, vector<32x32xf32>
    %cst = arith.constant dense<0.000000e+00> : vector<2x32xf32>
    %13 = tpu.matmul %9, %12, %cst {dimension_numbers = #tpu.dot_dimension_numbers<[1], [0], [0], [1], [0, 0, 1, 1], [], []>} : vector<2x32xf32>, vector<32x32xf32>, vector<2x32xf32> -> vector<2x32xf32>
    %c0_11 = arith.constant 0 : index
    %c0_12 = arith.constant 0 : index
    %c0_13 = arith.constant 0 : index
    %14 = vector.load %arg11[%c0_11, %c0_12, %c0_13] : memref<2x8x32xf32, #tpu.memory_space<vmem>>, vector<2x8x32xf32>
    %15 = vector.broadcast %5 : vector<1x32xf32> to vector<2x32xf32>
    %16 = arith.addf %13, %15 : vector<2x32xf32>
    %17 = vector.shape_cast %16 : vector<2x32xf32> to vector<2x1x32xf32>
    %18 = vector.broadcast %17 : vector<2x1x32xf32> to vector<2x8x32xf32>
    %19 = arith.addf %14, %18 : vector<2x8x32xf32>
    %20 = math.tanh %19 : vector<2x8x32xf32>
    %21 = vector.shape_cast %6 : vector<1x32xf32> to vector<1x1x32xf32>
    %22 = vector.broadcast %21 : vector<1x1x32xf32> to vector<2x8x32xf32>
    %23 = arith.mulf %20, %22 : vector<2x8x32xf32>
    %cst_14 = arith.constant dense<0.000000e+00> : vector<2x8xf32>
    %24 = vector.multi_reduction <add>, %23, %cst_14 [2] : vector<2x8x32xf32> to vector<2x8xf32>
    %cst_15 = arith.constant dense<0xFF800000> : vector<2xf32>
    %25 = vector.multi_reduction <maximumf>, %24, %cst_15 [1] : vector<2x8xf32> to vector<2xf32>
    %26 = vector.shape_cast %25 : vector<2xf32> to vector<2x1xf32>
    %27 = vector.broadcast %26 : vector<2x1xf32> to vector<2x8xf32>
    %28 = arith.subf %24, %27 : vector<2x8xf32>
    %29 = math.exp %28 : vector<2x8xf32>
    %c0_16 = arith.constant 0 : index
    %c0_17 = arith.constant 0 : index
    %30 = vector.load %arg3[%c0_16, %c0_17] : memref<2x8xf32, #tpu.memory_space<vmem>>, vector<2x8xf32>
    %31 = arith.mulf %29, %30 : vector<2x8xf32>
    %cst_18 = arith.constant dense<0.000000e+00> : vector<2xf32>
    %32 = vector.multi_reduction <add>, %31, %cst_18 [1] : vector<2x8xf32> to vector<2xf32>
    %33 = vector.shape_cast %32 : vector<2xf32> to vector<2x1xf32>
    %34 = tpu.reciprocal %33 {approx = true} : vector<2x1xf32> -> vector<2x1xf32>
    %35 = vector.broadcast %34 : vector<2x1xf32> to vector<2x8xf32>
    %36 = arith.mulf %31, %35 : vector<2x8xf32>
    %37 = vector.shape_cast %36 : vector<2x8xf32> to vector<2x8x1xf32>
    %38 = vector.broadcast %37 : vector<2x8x1xf32> to vector<2x8x32xf32>
    %39 = arith.mulf %38, %0 : vector<2x8x32xf32>
    %cst_19 = arith.constant dense<0.000000e+00> : vector<2x32xf32>
    %40 = vector.multi_reduction <add>, %39, %cst_19 [1] : vector<2x8x32xf32> to vector<2x32xf32>
    %c0_20 = arith.constant 0 : index
    %c0_21 = arith.constant 0 : index
    %c0_22 = arith.constant 0 : index
    %41 = vector.load %arg1[%c0_20, %c0_21, %c0_22] : memref<1x2x32xf32, #tpu.memory_space<vmem>>, vector<1x2x32xf32>
    %42 = vector.shape_cast %41 : vector<1x2x32xf32> to vector<2x32xf32>
    %43 = tpu.concatenate %42, %40, %8 in 1 : vector<2x32xf32>, vector<2x32xf32>, vector<2x32xf32> -> vector<2x96xf32>
    %c0_23 = arith.constant 0 : index
    %c0_24 = arith.constant 0 : index
    %44 = vector.load %arg5[%c0_23, %c0_24] : memref<96x128xf32, #tpu.memory_space<vmem>>, vector<96x128xf32>
    %cst_25 = arith.constant dense<0.000000e+00> : vector<2x128xf32>
    %45 = tpu.matmul %43, %44, %cst_25 {dimension_numbers = #tpu.dot_dimension_numbers<[1], [0], [0], [1], [0, 0, 1, 1], [], []>} : vector<2x96xf32>, vector<96x128xf32>, vector<2x128xf32> -> vector<2x128xf32>
    %46 = vector.broadcast %4 : vector<1x128xf32> to vector<2x128xf32>
    %47 = arith.addf %45, %46 : vector<2x128xf32>
    %48 = arith.negf %47 : vector<2x128xf32>
    %49 = math.exp %48 : vector<2x128xf32>
    %cst_26 = arith.constant 1.000000e+00 : f32
    %50 = vector.broadcast %cst_26 : f32 to vector<2x128xf32>
    %51 = arith.addf %50, %49 : vector<2x128xf32>
    %52 = arith.divf %50, %51 : vector<2x128xf32>
    %53 = math.tanh %47 : vector<2x128xf32>
    %54 = vector.extract_strided_slice %52 {offsets = [0, 32], sizes = [2, 32], strides = [1, 1]} : vector<2x128xf32> to vector<2x32xf32>
    %55 = arith.mulf %54, %10 : vector<2x32xf32>
    %56 = vector.extract_strided_slice %52 {offsets = [0, 0], sizes = [2, 32], strides = [1, 1]} : vector<2x128xf32> to vector<2x32xf32>
    %57 = vector.extract_strided_slice %53 {offsets = [0, 64], sizes = [2, 32], strides = [1, 1]} : vector<2x128xf32> to vector<2x32xf32>
    %58 = arith.mulf %56, %57 : vector<2x32xf32>
    %59 = arith.addf %55, %58 : vector<2x32xf32>
    %60 = vector.extract_strided_slice %52 {offsets = [0, 96], sizes = [2, 32], strides = [1, 1]} : vector<2x128xf32> to vector<2x32xf32>
    %61 = math.tanh %59 : vector<2x32xf32>
    %62 = arith.mulf %60, %61 : vector<2x32xf32>
    %63 = tpu.concatenate %62, %9 in 1 : vector<2x32xf32>, vector<2x32xf32> -> vector<2x64xf32>
    %c0_27 = arith.constant 0 : index
    %c0_28 = arith.constant 0 : index
    %64 = vector.load %arg6[%c0_27, %c0_28] : memref<64x128xf32, #tpu.memory_space<vmem>>, vector<64x128xf32>
    %cst_29 = arith.constant dense<0.000000e+00> : vector<2x128xf32>
    %65 = tpu.matmul %63, %64, %cst_29 {dimension_numbers = #tpu.dot_dimension_numbers<[1], [0], [0], [1], [0, 0, 1, 1], [], []>} : vector<2x64xf32>, vector<64x128xf32>, vector<2x128xf32> -> vector<2x128xf32>
    %66 = arith.negf %65 : vector<2x128xf32>
    %67 = math.exp %66 : vector<2x128xf32>
    %cst_30 = arith.constant 1.000000e+00 : f32
    %68 = vector.broadcast %cst_30 : f32 to vector<2x128xf32>
    %69 = arith.addf %68, %67 : vector<2x128xf32>
    %70 = arith.divf %68, %69 : vector<2x128xf32>
    %71 = math.tanh %65 : vector<2x128xf32>
    %72 = vector.extract_strided_slice %70 {offsets = [0, 32], sizes = [2, 32], strides = [1, 1]} : vector<2x128xf32> to vector<2x32xf32>
    %73 = arith.mulf %72, %11 : vector<2x32xf32>
    %74 = vector.extract_strided_slice %70 {offsets = [0, 0], sizes = [2, 32], strides = [1, 1]} : vector<2x128xf32> to vector<2x32xf32>
    %75 = vector.extract_strided_slice %71 {offsets = [0, 64], sizes = [2, 32], strides = [1, 1]} : vector<2x128xf32> to vector<2x32xf32>
    %76 = arith.mulf %74, %75 : vector<2x32xf32>
    %77 = arith.addf %73, %76 : vector<2x32xf32>
    %78 = vector.extract_strided_slice %70 {offsets = [0, 96], sizes = [2, 32], strides = [1, 1]} : vector<2x128xf32> to vector<2x32xf32>
    %79 = math.tanh %77 : vector<2x32xf32>
    %80 = arith.mulf %78, %79 : vector<2x32xf32>
    %81 = tpu.concatenate %62, %80, %59, %77 in 1 : vector<2x32xf32>, vector<2x32xf32>, vector<2x32xf32>, vector<2x32xf32> -> vector<2x128xf32>
    %c0_31 = arith.constant 0 : index
    %c0_32 = arith.constant 0 : index
    %82 = vector.load %arg10[%c0_31, %c0_32] : memref<2x128xf32, #tpu.memory_space<vmem>>, vector<2x128xf32>
    tpu.vector_store %arg10[%c0_31, %c0_32], %81 {strides = array<i32>} : memref<2x128xf32, #tpu.memory_space<vmem>>, vector<2x128xf32>,
    return
  }
  func.func @transform_0(%arg0: i32) -> (i32, i32, i32) {
    %c0_i32 = arith.constant 0 : i32
    %c0_i32_0 = arith.constant 0 : i32
    %c0_i32_1 = arith.constant 0 : i32
    return %arg0, %c0_i32, %c0_i32_0 : i32, i32, i32
  }
  func.func @transform_1(%arg0: i32) -> (i32, i32, i32) {
    %c0_i32 = arith.constant 0 : i32
    %c0_i32_0 = arith.constant 0 : i32
    %c0_i32_1 = arith.constant 0 : i32
    %c0_i32_2 = arith.constant 0 : i32
    return %c0_i32, %c0_i32_0, %c0_i32_1 : i32, i32, i32
  }
  func.func @transform_2(%arg0: i32) -> (i32, i32) {
    %c0_i32 = arith.constant 0 : i32
    %c0_i32_0 = arith.constant 0 : i32
    %c0_i32_1 = arith.constant 0 : i32
    return %c0_i32, %c0_i32_0 : i32, i32
  }
  func.func @transform_3(%arg0: i32) -> (i32, i32) {
    %c0_i32 = arith.constant 0 : i32
    %c0_i32_0 = arith.constant 0 : i32
    %c0_i32_1 = arith.constant 0 : i32
    return %c0_i32, %c0_i32_0 : i32, i32
  }
  func.func @transform_4(%arg0: i32) -> (i32, i32) {
    %c0_i32 = arith.constant 0 : i32
    %c0_i32_0 = arith.constant 0 : i32
    %c0_i32_1 = arith.constant 0 : i32
    return %c0_i32, %c0_i32_0 : i32, i32
  }
  func.func @transform_5(%arg0: i32) -> (i32, i32) {
    %c0_i32 = arith.constant 0 : i32
    %c0_i32_0 = arith.constant 0 : i32
    %c0_i32_1 = arith.constant 0 : i32
    return %c0_i32, %c0_i32_0 : i32, i32
  }
  func.func @transform_6(%arg0: i32) -> (i32, i32) {
    %c0_i32 = arith.constant 0 : i32
    %c0_i32_0 = arith.constant 0 : i32
    %c0_i32_1 = arith.constant 0 : i32
    return %c0_i32, %c0_i32_0 : i32, i32
  }
  func.func @transform_7(%arg0: i32) -> (i32, i32) {
    %c0_i32 = arith.constant 0 : i32
    %c0_i32_0 = arith.constant 0 : i32
    %c0_i32_1 = arith.constant 0 : i32
    return %c0_i32, %c0_i32_0 : i32, i32
  }
  func.func @transform_8(%arg0: i32) -> (i32, i32) {
    %c0_i32 = arith.constant 0 : i32
    %c0_i32_0 = arith.constant 0 : i32
    %c0_i32_1 = arith.constant 0 : i32
    return %c0_i32, %c0_i32_0 : i32, i32
  }
  func.func @transform_9(%arg0: i32) -> (i32, i32) {
    %c0_i32 = arith.constant 0 : i32
    %c0_i32_0 = arith.constant 0 : i32
    %c0_i32_1 = arith.constant 0 : i32
    return %c0_i32, %c0_i32_0 : i32, i32
  }
}

</mosaic_0001>

<llo_original>
// kernel: show_attend_tell_core.1
$region0: #{show_attend_tell_core.1}
  #allocation0 [shape = 'u32[]', space=smem, size = 0x4, offset = 0x4, fixed_abs, tag = 'smem constant byte address 0x4 - core index']
  #allocation1 [shape = 'u32[144,128]{1,0:T(1,128)}', space=vmem, size = 0x12000, scoped, tag = 'internal scratch']
  #allocation2 [shape = 'f32[2,8,32]{2,1,0:T(8,128)}', space=vmem, size = 0x2000, scoped, tag = 'scratch operand']
  %s0 = inlined_call_operand.vmem [shape: f32[1,2,32], index: 0, kind: input, shape index: {}]
  %s1 = inlined_call_operand.vmem [shape: f32[2,8,32], index: 1, kind: input, shape index: {}]
  %s2 = inlined_call_operand.vmem [shape: f32[2,8], index: 2, kind: input, shape index: {}]
  %s3 = inlined_call_operand.vmem [shape: f32[2,128], index: 3, kind: input, shape index: {}, may-alias: {3,9}]
  %s4 = inlined_call_operand.vmem [shape: f32[96,128], index: 4, kind: input, shape index: {}]
  %s5 = inlined_call_operand.vmem [shape: f32[64,128], index: 5, kind: input, shape index: {}]
  %s6 = inlined_call_operand.vmem [shape: f32[32,32], index: 6, kind: input, shape index: {}]
  %s7 = inlined_call_operand.vmem [shape: f32[32,32], index: 7, kind: input, shape index: {}]
  %s8 = inlined_call_operand.vmem [shape: f32[8,128], index: 8, kind: input, shape index: {}]
  %s9 = inlined_call_operand.vmem [shape: f32[2,128], index: 9, kind: output, shape index: {}, may-alias: {3,9}]
  %s10 = sld [smem:[#allocation0]]
  $region50: #{show_attend_tell_core.1} parent=0
    _
  %s12 = ssub.s32 1, %s10
  %s13 = scalar_select 0, %s12, %s10
  // Predicated region
  $region2: #{show_attend_tell_core.1} parent=0 // pred_check
    _
  $region3: #{show_attend_tell_core.1} parent=0 // pred_check_branch
    %15 = sbr.rel (0) target = $region5
  $region4: #{show_attend_tell_core.1} parent=0 // pred_region
    _
  $region5: #{show_attend_tell_core.1} parent=0 // pred_fallthru
    _
  // Predicated region
  $region6: #{show_attend_tell_core.1} parent=0 // pred_check
    _
  $region7: #{show_attend_tell_core.1} parent=0 // pred_check_branch
    %17 = sbr.rel (0) target = $region9
  $region8: #{show_attend_tell_core.1} parent=0 // pred_region
    _
  $region9: #{show_attend_tell_core.1} parent=0 // pred_fallthru
    _
  // Predicated region
  $region10: #{show_attend_tell_core.1} parent=0 // pred_check
    _
  $region11: #{show_attend_tell_core.1} parent=0 // pred_check_branch
    %19 = sbr.rel (0) target = $region13
  $region12: #{show_attend_tell_core.1} parent=0 // pred_region
    _
  $region13: #{show_attend_tell_core.1} parent=0 // pred_fallthru
    _
  // Predicated region
  $region14: #{show_attend_tell_core.1} parent=0 // pred_check
    _
  $region15: #{show_attend_tell_core.1} parent=0 // pred_check_branch
    %21 = sbr.rel (0) target = $region17
  $region16: #{show_attend_tell_core.1} parent=0 // pred_region
    _
  $region17: #{show_attend_tell_core.1} parent=0 // pred_fallthru
    _
  // Predicated region
  $region18: #{show_attend_tell_core.1} parent=0 // pred_check
    _
  $region19: #{show_attend_tell_core.1} parent=0 // pred_check_branch
    %23 = sbr.rel (0) target = $region21
  $region20: #{show_attend_tell_core.1} parent=0 // pred_region
    _
  $region21: #{show_attend_tell_core.1} parent=0 // pred_fallthru
    _
  // Predicated region
  $region22: #{show_attend_tell_core.1} parent=0 // pred_check
    _
  $region23: #{show_attend_tell_core.1} parent=0 // pred_check_branch
    %25 = sbr.rel (0) target = $region25
  $region24: #{show_attend_tell_core.1} parent=0 // pred_region
    _
  $region25: #{show_attend_tell_core.1} parent=0 // pred_fallthru
    _
  // Predicated region
  $region26: #{show_attend_tell_core.1} parent=0 // pred_check
    _
  $region27: #{show_attend_tell_core.1} parent=0 // pred_check_branch
    %27 = sbr.rel (0) target = $region29
  $region28: #{show_attend_tell_core.1} parent=0 // pred_region
    _
  $region29: #{show_attend_tell_core.1} parent=0 // pred_fallthru
    _
  // Predicated region
  $region30: #{show_attend_tell_core.1} parent=0 // pred_check
    _
  $region31: #{show_attend_tell_core.1} parent=0 // pred_check_branch
    %29 = sbr.rel (0) target = $region33
  $region32: #{show_attend_tell_core.1} parent=0 // pred_region
    _
  $region33: #{show_attend_tell_core.1} parent=0 // pred_fallthru
    _
  // Predicated region
  $region34: #{show_attend_tell_core.1} parent=0 // pred_check
    _
  $region35: #{show_attend_tell_core.1} parent=0 // pred_check_branch
    %31 = sbr.rel (0) target = $region37
  $region36: #{show_attend_tell_core.1} parent=0 // pred_region
    _
  $region37: #{show_attend_tell_core.1} parent=0 // pred_fallthru
    _
  %v32 = vld [vmem:[%s1] sm:$0xff]
  %v33 = vld [vmem:[%s1 + $0x8] sm:$0xff]
  %p34 = scmp.eq.s32.totalorder 0, 0
  // Predicated region
  $region38: #{show_attend_tell_core.1} parent=0 // pred_check
    %p35 = pneg %p34
  $region39: #{show_attend_tell_core.1} parent=0 // pred_check_branch
    %37 = sbr.rel (%p35) target = $region41
  $region40: #{show_attend_tell_core.1} parent=0 // pred_region
    %v38 = vld [vmem:[%s3] sm:$0x3]
    %39 = vst [vmem:[%s9] sm:$0x3] %v38
    %v40 = vld [vmem:[%s6] sm:$0xff]
    %v41 = vld [vmem:[%s6 + $0x8] sm:$0xff]
    %v42 = vld [vmem:[%s6 + $0x10] sm:$0xff]
    %v43 = vld [vmem:[%s6 + $0x18] sm:$0xff]
    %vm44 = vcmask 261120
    %v46 = vsel %vm44, %v32, 0
    %v49 = vsel %vm44, %v33, 0
    %51 = vmatprep.subr.mxu0 0.0
    %52 = vmatpush1.msra.mxu0 0.0
    %53 = vmatprep.subr.mxu0 0.0
    %54 = vmatpush1.msra.mxu0 0.0
    %55 = vmatprep.subr.mxu0 0.0
    %56 = vmatpush1.msra.mxu0 0.0
    %57 = vmatprep.subr.mxu0 0.0
    %58 = vmatpush1.msra.mxu0 0.0
    %59 = vmatprep.subr.mxu0 0.0
    %60 = vmatpush1.msra.mxu0 0.0
    %61 = vmatprep.subr.mxu0 0.0
    %62 = vmatpush1.msra.mxu0 0.0
    %63 = vmatprep.subr.mxu0 0.0
    %64 = vmatpush1.msra.mxu0 0.0
    %65 = vmatprep.subr.mxu0 0.0
    %66 = vmatpush1.msra.mxu0 0.0
    %67 = vmatprep.subr.mxu0 0.0
    %68 = vmatpush1.msra.mxu0 0.0
    %69 = vmatprep.subr.mxu0 0.0
    %70 = vmatpush1.msra.mxu0 0.0
    %71 = vmatprep.subr.mxu0 0.0
    %72 = vmatpush1.msra.mxu0 0.0
    %73 = vmatprep.subr.mxu0 0.0
    %74 = vmatpush1.msra.mxu0 0.0
    %75 = vmatprep.subr.mxu0 0.0
    %76 = vmatpush1.msra.mxu0 %v43
    %77 = vmatprep.subr.mxu0 0.0
    %78 = vmatpush1.msra.mxu0 %v42
    %79 = vmatprep.subr.mxu0 0.0
    %80 = vmatpush1.msra.mxu0 %v41
    %81 = vmatprep.subr.mxu0 0.0
    %82 = vmatpush1.msra.mxu0 %v40
    %83 = vmatprep.subr.mxu0 0.0
    %84 = vmatpush2.msra.mxu0 0.0
    %85 = vmatprep.subr.mxu0 0.0
    %86 = vmatpush2.msra.mxu0 0.0
    %87 = vmatprep.subr.mxu0 0.0
    %88 = vmatpush2.msra.mxu0 0.0
    %89 = vmatprep.subr.mxu0 0.0
    %90 = vmatpush2.msra.mxu0 0.0
    %91 = vmatprep.subr.mxu0 0.0
    %92 = vmatpush2.msra.mxu0 0.0
    %93 = vmatprep.subr.mxu0 0.0
    %94 = vmatpush2.msra.mxu0 0.0
    %95 = vmatprep.subr.mxu0 0.0
    %96 = vmatpush2.msra.mxu0 0.0
    %97 = vmatprep.subr.mxu0 0.0
    %98 = vmatpush2.msra.mxu0 0.0
    %99 = vmatprep.subr.mxu0 0.0
    %100 = vmatpush2.msra.mxu0 0.0
    %101 = vmatprep.subr.mxu0 0.0
    %102 = vmatpush2.msra.mxu0 0.0
    %103 = vmatprep.subr.mxu0 0.0
    %104 = vmatpush2.msra.mxu0 0.0
    %105 = vmatprep.subr.mxu0 0.0
    %106 = vmatpush2.msra.mxu0 0.0
    %107 = vmatprep.subr.mxu0 0.0
    %108 = vmatpush2.msra.mxu0 0.0
    %109 = vmatprep.subr.mxu0 0.0
    %110 = vmatpush2.msra.mxu0 0.0
    %111 = vmatprep.subr.mxu0 0.0
    %112 = vmatpush2.msra.mxu0 0.0
    %113 = vmatprep.subr.mxu0 0.0
    %114 = vmatpush2.msra.mxu0 0.0
    %115 = vmatprep.mubr.f32.mxu0 0.0
    %116 = vmatmul.mubr.f32.gmra.mxu0 %v46
    %v117 = vpop.f32.mrf.mxu0
    %v118 = vadd.f32 0.0, %v117
    %v119 = vpop.f32.mrf.mxu0
    %120 = vmatprep.mubr.f32.mxu0 0.0
    %121 = vmatmul.mubr.f32.gmra.mxu0 %v49
    %v122 = vpop.f32.mrf.mxu0
    %v123 = vadd.f32 0.0, %v122
    %v124 = vpop.f32.mrf.mxu0
    %125 = vdwg.mxu0
    %126 = vst.msk [vmem:[#allocation2] sm:$0xff] %vm44, %v118
    %127 = vst.msk [vmem:[#allocation2 + $0x8] sm:$0xff] %vm44, %v123
  $region41: #{show_attend_tell_core.1} parent=0 // pred_fallthru
    _
  %v128 = vld [vmem:[%s8] sm:$0x1]
  %v129 = vld [vmem:[%s8 + $0x1] sm:$0x1]
  %v130 = vld [vmem:[%s8 + $0x2] sm:$0x1]
  %v131 = vld [vmem:[%s9] sm:$0x3]
  %v132 = vld [vmem:[%s7] sm:$0xff]
  %v133 = vld [vmem:[%s7 + $0x8] sm:$0xff]
  %v134 = vld [vmem:[%s7 + $0x10] sm:$0xff]
  %v135 = vld [vmem:[%s7 + $0x18] sm:$0xff]
  %v136 = vld [vmem:[#allocation2] sm:$0xff]
  %v137 = vld [vmem:[#allocation2 + $0x8] sm:$0xff]
  %v138 = vlaneseq
  %v139 = vshrl.u32 %v138, 7
  %v140 = vsub.s32 0, %v139
  %v141 = vrot.slane %v129, %v140
  %143 = vrot.lane.b32.xlu0 %v131, 96
  %v144 = vpop.permute.xlu0 %143
  %vm145 = vcmask 261120
  %v146 = vsel %vm145, %v144, 0
  %148 = vmatprep.subr.mxu0 0.0
  %149 = vmatpush1.msra.mxu0 0.0
  %150 = vmatprep.subr.mxu0 0.0
  %151 = vmatpush1.msra.mxu0 0.0
  %152 = vmatprep.subr.mxu0 0.0
  %153 = vmatpush1.msra.mxu0 0.0
  %154 = vmatprep.subr.mxu0 0.0
  %155 = vmatpush1.msra.mxu0 0.0
  %156 = vmatprep.subr.mxu0 0.0
  %157 = vmatpush1.msra.mxu0 0.0
  %158 = vmatprep.subr.mxu0 0.0
  %159 = vmatpush1.msra.mxu0 0.0
  %160 = vmatprep.subr.mxu0 0.0
  %161 = vmatpush1.msra.mxu0 0.0
  %162 = vmatprep.subr.mxu0 0.0
  %163 = vmatpush1.msra.mxu0 0.0
  %164 = vmatprep.subr.mxu0 0.0
  %165 = vmatpush1.msra.mxu0 0.0
  %166 = vmatprep.subr.mxu0 0.0
  %167 = vmatpush1.msra.mxu0 0.0
  %168 = vmatprep.subr.mxu0 0.0
  %169 = vmatpush1.msra.mxu0 0.0
  %170 = vmatprep.subr.mxu0 0.0
  %171 = vmatpush1.msra.mxu0 0.0
  %172 = vmatprep.subr.mxu0 0.0
  %173 = vmatpush1.msra.mxu0 %v135
  %174 = vmatprep.subr.mxu0 0.0
  %175 = vmatpush1.msra.mxu0 %v134
  %176 = vmatprep.subr.mxu0 0.0
  %177 = vmatpush1.msra.mxu0 %v133
  %178 = vmatprep.subr.mxu0 0.0
  %179 = vmatpush1.msra.mxu0 %v132
  %180 = vmatprep.subr.mxu0 0.0
  %181 = vmatpush2.msra.mxu0 0.0
  %182 = vmatprep.subr.mxu0 0.0
  %183 = vmatpush2.msra.mxu0 0.0
  %184 = vmatprep.subr.mxu0 0.0
  %185 = vmatpush2.msra.mxu0 0.0
  %186 = vmatprep.subr.mxu0 0.0
  %187 = vmatpush2.msra.mxu0 0.0
  %188 = vmatprep.subr.mxu0 0.0
  %189 = vmatpush2.msra.mxu0 0.0
  %190 = vmatprep.subr.mxu0 0.0
  %191 = vmatpush2.msra.mxu0 0.0
  %192 = vmatprep.subr.mxu0 0.0
  %193 = vmatpush2.msra.mxu0 0.0
  %194 = vmatprep.subr.mxu0 0.0
  %195 = vmatpush2.msra.mxu0 0.0
  %196 = vmatprep.subr.mxu0 0.0
  %197 = vmatpush2.msra.mxu0 0.0
  %198 = vmatprep.subr.mxu0 0.0
  %199 = vmatpush2.msra.mxu0 0.0
  %200 = vmatprep.subr.mxu0 0.0
  %201 = vmatpush2.msra.mxu0 0.0
  %202 = vmatprep.subr.mxu0 0.0
  %203 = vmatpush2.msra.mxu0 0.0
  %204 = vmatprep.subr.mxu0 0.0
  %205 = vmatpush2.msra.mxu0 0.0
  %206 = vmatprep.subr.mxu0 0.0
  %207 = vmatpush2.msra.mxu0 0.0
  %208 = vmatprep.subr.mxu0 0.0
  %209 = vmatpush2.msra.mxu0 0.0
  %210 = vmatprep.subr.mxu0 0.0
  %211 = vmatpush2.msra.mxu0 0.0
  %212 = vmatprep.mubr.f32.mxu0 0.0
  %213 = vmatmul.mubr.f32.gmra.mxu0 %v146
  %v214 = vpop.f32.mrf.mxu0
  %v215 = vadd.f32 %v141, %v214
  %v216 = vpop.f32.mrf.mxu0
  %217 = vdwg.mxu0
  %v220 = vunpack.c.l.s4 1966171168
  %v221 = vunpack.c.0.s8 %v220
  %v222 = vlaneseq
  %v223 = vshrl.u32 %v222, 7
  %v224 = vsub.s32 %v221, %v223
  %v225 = vrot.slane %v215, %v224
  %v226 = vcombine.high %v225, %v225
  %v228 = vunpack.c.l.s4 1966171168
  %v229 = vunpack.c.0.s8 %v228
  %v230 = vlaneseq
  %v231 = vshrl.u32 %v230, 7
  %v232 = vsub.s32 %v229, %v231
  %v233 = vrot.slane %v225, %v232
  %v235 = vunpack.c.l.s4 1966171168
  %v236 = vunpack.c.0.s8 %v235
  %v237 = vlaneseq
  %v238 = vshrl.u32 %v237, 7
  %v239 = vsub.s32 %v236, %v238
  %v240 = vrot.slane %v226, %v239
  %v241 = vlaneseq
  %v242 = vshrl.u32 %v241, 7
  %v243 = vsub.s32 0, %v242
  %v244 = vrot.slane %v233, %v243
  %v245 = vlaneseq
  %v246 = vshrl.u32 %v245, 7
  %v247 = vsub.s32 0, %v246
  %v248 = vrot.slane %v240, %v247
  %v251 = vadd.f32 %v136, %v244
  %v252 = vadd.f32 %v137, %v248
  %v253 = vtanh.pop %v251
  %v254 = vtanh.pop %v252
  %v255 = vlaneseq
  %v256 = vshrl.u32 %v255, 7
  %v257 = vsub.s32 0, %v256
  %v258 = vrot.slane %v130, %v257
  %v259 = vmul.f32 %v253, %v258
  %v260 = vmul.f32 %v254, %v258
  %v261 = vsel %vm145, %v259, 0.0
  %262 = vadd.xlane.f32.xlu0 %v261
  %v263 = vpop.xlane.xlu0 %262
  %v264 = vsel %vm145, %v260, 0.0
  %265 = vadd.xlane.f32.xlu0 %v264
  %v266 = vpop.xlane.xlu0 %265
  %v269 = vlaneseq
  %v270 = vand.u32 %v269, 127
  %v271 = vlaneseq
  %v272 = vshrl.u32 %v271, 7
  %v273 = vsub.s32 %v270, %v272
  %v274 = vrot.slane %v263, %v273
  %v275 = vlaneseq
  %v276 = vshrl.u32 %v275, 7
  %v277 = vsub.s32 %v270, %v276
  %v278 = vrot.slane %v266, %v277
  %vm279 = vcmask 1041409
  %v280 = vsel %vm279, %v278, %v274
  %vm282 = vcmask 58368
  %v283 = vsel %vm282, %v280, -inf
  %284 = vmax.xlane.f32.xlu0 %v283
  %v285 = vpop.xlane.xlu0 %284
  %v287 = vlaneseq
  %v288 = vshrl.u32 %v287, 7
  %v289 = vsub.s32 0, %v288
  %v290 = vrot.slane %v285, %v289
  %v291 = vlaneseq
  %v292 = vshrl.u32 %v291, 7
  %v293 = vsub.s32 1, %v292
  %v294 = vrot.slane %v285, %v293
  %v297 = vsub.f32 %v263, %v290
  %v298 = vsub.f32 %v266, %v294
  %v299 = vmul.f32 %v297, 1.442695
  %v300 = vpow.pop %v299
  %v301 = vmul.f32 %v298, 1.442695
  %v302 = vpow.pop %v301
  %v303 = vld [vmem:[%s2] sm:$0x3]
  %v305 = vlaneseq
  %v306 = vshrl.u32 %v305, 7
  %v307 = vsub.s32 0, %v306
  %v308 = vrot.slane %v303, %v307
  %310 = vbcast.lane.b32.xlu0 %v308, 256
  %v311 = vpop.permute.xlu0 %310
  %v312 = vlaneseq
  %v313 = vshrl.u32 %v312, 7
  %v314 = vsub.s32 1, %v313
  %v315 = vrot.slane %v303, %v314
  %317 = vbcast.lane.b32.xlu0 %v315, 256
  %v318 = vpop.permute.xlu0 %317
  %v321 = vmul.f32 %v300, %v311
  %v322 = vmul.f32 %v302, %v318
  %325 = vset.pattern.permute.xlu0 0
  %326 = vperm.xlu0 %325, %v321
  %v327 = vpop.permute.xlu0 %326
  %328 = vset.pattern.permute.xlu0 0
  %329 = vperm.xlu0 %328, %v322
  %v330 = vpop.permute.xlu0 %329
  %v331 = vlaneseq
  %v332 = vshrl.u32 %v331, 7
  %v333 = vsub.s32 %v270, %v332
  %v334 = vrot.slane %v327, %v333
  %v335 = vlaneseq
  %v336 = vshrl.u32 %v335, 7
  %v337 = vsub.s32 %v270, %v336
  %v338 = vrot.slane %v330, %v337
  %v339 = vsel %vm279, %v338, %v334
  %v341 = vsel %vm282, %v339, 0.0
  %342 = vadd.xlane.f32.xlu0 %v341
  %v343 = vpop.xlane.xlu0 %342
  %v344 = vrcp.pop %v343
  %v346 = vlaneseq
  %v347 = vshrl.u32 %v346, 7
  %v348 = vsub.s32 0, %v347
  %v349 = vrot.slane %v344, %v348
  %v350 = vlaneseq
  %v351 = vshrl.u32 %v350, 7
  %v352 = vsub.s32 1, %v351
  %v353 = vrot.slane %v344, %v352
  %v356 = vmul.f32 %v321, %v349
  %v357 = vmul.f32 %v322, %v353
  %359 = vset.pattern.permute.xlu0 0
  %360 = vperm.xlu0 %359, %v356
  %v361 = vpop.permute.xlu0 %360
  %364 = vset.pattern.permute.xlu0 0
  %365 = vperm.xlu0 %364, %v357
  %v366 = vpop.permute.xlu0 %365
  %v368 = vmul.f32 %v361, %v32
  %v369 = vmul.f32 %v366, %v33
  %v370 = vsel %vm145, %v368, 0.0
  %v371 = vrot.slane %v370, 4
  %v372 = vadd.f32 %v370, %v371
  %v373 = vrot.slane %v372, 2
  %v374 = vadd.f32 %v372, %v373
  %v375 = vrot.slane %v374, 1
  %v376 = vadd.f32 %v374, %v375
  %v377 = vsel %vm145, %v369, 0.0
  %v378 = vrot.slane %v377, 4
  %v379 = vadd.f32 %v377, %v378
  %v380 = vrot.slane %v379, 2
  %v381 = vadd.f32 %v379, %v380
  %v382 = vrot.slane %v381, 1
  %v383 = vadd.f32 %v381, %v382
  %v384 = vld [vmem:[%s0] sm:$0x3]
  %v387 = vsel %vm279, %v383, %v376
  %388 = vrot.lane.b32.xlu0 %v387, 32
  %v389 = vpop.permute.xlu0 %388
  %391 = vrot.lane.b32.xlu0 %v131, 64
  %v392 = vpop.permute.xlu0 %391
  %v394 = vsel %vm145, %v384, %v389
  %vm395 = vcmask 523264
  %v396 = vsel %vm395, %v394, %v392
  %v397 = vld [vmem:[%s4] sm:$0xff]
  %v398 = vld [vmem:[%s4 + $0x8] sm:$0xff]
  %v399 = vld [vmem:[%s4 + $0x10] sm:$0xff]
  %v400 = vld [vmem:[%s4 + $0x18] sm:$0xff]
  %v401 = vld [vmem:[%s4 + $0x20] sm:$0xff]
  %v402 = vld [vmem:[%s4 + $0x28] sm:$0xff]
  %v403 = vld [vmem:[%s4 + $0x30] sm:$0xff]
  %v404 = vld [vmem:[%s4 + $0x38] sm:$0xff]
  %v405 = vld [vmem:[%s4 + $0x40] sm:$0xff]
  %v406 = vld [vmem:[%s4 + $0x48] sm:$0xff]
  %v407 = vld [vmem:[%s4 + $0x50] sm:$0xff]
  %v408 = vld [vmem:[%s4 + $0x58] sm:$0xff]
  %v409 = vlaneseq
  %v410 = vshrl.u32 %v409, 7
  %v411 = vsub.s32 0, %v410
  %v412 = vrot.slane %v128, %v411
  %vm413 = vcmask 785408
  %v415 = vsel %vm413, %v396, 0
  %417 = vmatprep.subr.mxu0 0.0
  %418 = vmatpush1.msra.mxu0 0.0
  %419 = vmatprep.subr.mxu0 0.0
  %420 = vmatpush1.msra.mxu0 0.0
  %421 = vmatprep.subr.mxu0 0.0
  %422 = vmatpush1.msra.mxu0 0.0
  %423 = vmatprep.subr.mxu0 0.0
  %424 = vmatpush1.msra.mxu0 0.0
  %425 = vmatprep.subr.mxu0 0.0
  %426 = vmatpush1.msra.mxu0 %v408
  %427 = vmatprep.subr.mxu0 0.0
  %428 = vmatpush1.msra.mxu0 %v407
  %429 = vmatprep.subr.mxu0 0.0
  %430 = vmatpush1.msra.mxu0 %v406
  %431 = vmatprep.subr.mxu0 0.0
  %432 = vmatpush1.msra.mxu0 %v405
  %433 = vmatprep.subr.mxu0 0.0
  %434 = vmatpush1.msra.mxu0 %v404
  %435 = vmatprep.subr.mxu0 0.0
  %436 = vmatpush1.msra.mxu0 %v403
  %437 = vmatprep.subr.mxu0 0.0
  %438 = vmatpush1.msra.mxu0 %v402
  %439 = vmatprep.subr.mxu0 0.0
  %440 = vmatpush1.msra.mxu0 %v401
  %441 = vmatprep.subr.mxu0 0.0
  %442 = vmatpush1.msra.mxu0 %v400
  %443 = vmatprep.subr.mxu0 0.0
  %444 = vmatpush1.msra.mxu0 %v399
  %445 = vmatprep.subr.mxu0 0.0
  %446 = vmatpush1.msra.mxu0 %v398
  %447 = vmatprep.subr.mxu0 0.0
  %448 = vmatpush1.msra.mxu0 %v397
  %449 = vmatprep.subr.mxu0 0.0
  %450 = vmatpush2.msra.mxu0 0.0
  %451 = vmatprep.subr.mxu0 0.0
  %452 = vmatpush2.msra.mxu0 0.0
  %453 = vmatprep.subr.mxu0 0.0
  %454 = vmatpush2.msra.mxu0 0.0
  %455 = vmatprep.subr.mxu0 0.0
  %456 = vmatpush2.msra.mxu0 0.0
  %457 = vmatprep.subr.mxu0 0.0
  %458 = vmatpush2.msra.mxu0 0.0
  %459 = vmatprep.subr.mxu0 0.0
  %460 = vmatpush2.msra.mxu0 0.0
  %461 = vmatprep.subr.mxu0 0.0
  %462 = vmatpush2.msra.mxu0 0.0
  %463 = vmatprep.subr.mxu0 0.0
  %464 = vmatpush2.msra.mxu0 0.0
  %465 = vmatprep.subr.mxu0 0.0
  %466 = vmatpush2.msra.mxu0 0.0
  %467 = vmatprep.subr.mxu0 0.0
  %468 = vmatpush2.msra.mxu0 0.0
  %469 = vmatprep.subr.mxu0 0.0
  %470 = vmatpush2.msra.mxu0 0.0
  %471 = vmatprep.subr.mxu0 0.0
  %472 = vmatpush2.msra.mxu0 0.0
  %473 = vmatprep.subr.mxu0 0.0
  %474 = vmatpush2.msra.mxu0 0.0
  %475 = vmatprep.subr.mxu0 0.0
  %476 = vmatpush2.msra.mxu0 0.0
  %477 = vmatprep.subr.mxu0 0.0
  %478 = vmatpush2.msra.mxu0 0.0
  %479 = vmatprep.subr.mxu0 0.0
  %480 = vmatpush2.msra.mxu0 0.0
  %481 = vmatprep.mubr.f32.mxu0 0.0
  %482 = vmatmul.mubr.f32.gmra.mxu0 %v415
  %v483 = vpop.f32.mrf.mxu0
  %v484 = vadd.f32 %v412, %v483
  %v485 = vpop.f32.mrf.mxu0
  %486 = vdwg.mxu0
  %v487 = vxor.u32 %v484, 2147483648
  %v488 = vmul.f32 %v487, 1.442695
  %v489 = vpow.pop %v488
  %v490 = vadd.f32 %v489, 1.0
  %v491 = vrcp.pop %v490
  %v492 = vmul.f32 1.0, %v491
  %v493 = vtanh.pop %v484
  %v495 = vmul.f32 %v492, %v144
  %497 = vrot.lane.b32.xlu0 %v493, 64
  %v498 = vpop.permute.xlu0 %497
  %v500 = vmul.f32 %v492, %v498
  %502 = vrot.lane.b32.xlu0 %v500, 32
  %v503 = vpop.permute.xlu0 %502
  %v505 = vadd.f32 %v495, %v503
  %v506 = vtanh.pop %v505
  %508 = vrot.lane.b32.xlu0 %v506, 64
  %v509 = vpop.permute.xlu0 %508
  %v511 = vmul.f32 %v492, %v509
  %513 = vrot.lane.b32.xlu0 %v511, 32
  %v514 = vpop.permute.xlu0 %513
  %v516 = vsel %vm145, %v514, %v131
  %v517 = vld [vmem:[%s5] sm:$0xff]
  %v518 = vld [vmem:[%s5 + $0x8] sm:$0xff]
  %v519 = vld [vmem:[%s5 + $0x10] sm:$0xff]
  %v520 = vld [vmem:[%s5 + $0x18] sm:$0xff]
  %v521 = vld [vmem:[%s5 + $0x20] sm:$0xff]
  %v522 = vld [vmem:[%s5 + $0x28] sm:$0xff]
  %v523 = vld [vmem:[%s5 + $0x30] sm:$0xff]
  %v524 = vld [vmem:[%s5 + $0x38] sm:$0xff]
  %v526 = vsel %vm395, %v516, 0
  %528 = vmatprep.subr.mxu0 0.0
  %529 = vmatpush1.msra.mxu0 0.0
  %530 = vmatprep.subr.mxu0 0.0
  %531 = vmatpush1.msra.mxu0 0.0
  %532 = vmatprep.subr.mxu0 0.0
  %533 = vmatpush1.msra.mxu0 0.0
  %534 = vmatprep.subr.mxu0 0.0
  %535 = vmatpush1.msra.mxu0 0.0
  %536 = vmatprep.subr.mxu0 0.0
  %537 = vmatpush1.msra.mxu0 0.0
  %538 = vmatprep.subr.mxu0 0.0
  %539 = vmatpush1.msra.mxu0 0.0
  %540 = vmatprep.subr.mxu0 0.0
  %541 = vmatpush1.msra.mxu0 0.0
  %542 = vmatprep.subr.mxu0 0.0
  %543 = vmatpush1.msra.mxu0 0.0
  %544 = vmatprep.subr.mxu0 0.0
  %545 = vmatpush1.msra.mxu0 %v524
  %546 = vmatprep.subr.mxu0 0.0
  %547 = vmatpush1.msra.mxu0 %v523
  %548 = vmatprep.subr.mxu0 0.0
  %549 = vmatpush1.msra.mxu0 %v522
  %550 = vmatprep.subr.mxu0 0.0
  %551 = vmatpush1.msra.mxu0 %v521
  %552 = vmatprep.subr.mxu0 0.0
  %553 = vmatpush1.msra.mxu0 %v520
  %554 = vmatprep.subr.mxu0 0.0
  %555 = vmatpush1.msra.mxu0 %v519
  %556 = vmatprep.subr.mxu0 0.0
  %557 = vmatpush1.msra.mxu0 %v518
  %558 = vmatprep.subr.mxu0 0.0
  %559 = vmatpush1.msra.mxu0 %v517
  %560 = vmatprep.subr.mxu0 0.0
  %561 = vmatpush2.msra.mxu0 0.0
  %562 = vmatprep.subr.mxu0 0.0
  %563 = vmatpush2.msra.mxu0 0.0
  %564 = vmatprep.subr.mxu0 0.0
  %565 = vmatpush2.msra.mxu0 0.0
  %566 = vmatprep.subr.mxu0 0.0
  %567 = vmatpush2.msra.mxu0 0.0
  %568 = vmatprep.subr.mxu0 0.0
  %569 = vmatpush2.msra.mxu0 0.0
  %570 = vmatprep.subr.mxu0 0.0
  %571 = vmatpush2.msra.mxu0 0.0
  %572 = vmatprep.subr.mxu0 0.0
  %573 = vmatpush2.msra.mxu0 0.0
  %574 = vmatprep.subr.mxu0 0.0
  %575 = vmatpush2.msra.mxu0 0.0
  %576 = vmatprep.subr.mxu0 0.0
  %577 = vmatpush2.msra.mxu0 0.0
  %578 = vmatprep.subr.mxu0 0.0
  %579 = vmatpush2.msra.mxu0 0.0
  %580 = vmatprep.subr.mxu0 0.0
  %581 = vmatpush2.msra.mxu0 0.0
  %582 = vmatprep.subr.mxu0 0.0
  %583 = vmatpush2.msra.mxu0 0.0
  %584 = vmatprep.subr.mxu0 0.0
  %585 = vmatpush2.msra.mxu0 0.0
  %586 = vmatprep.subr.mxu0 0.0
  %587 = vmatpush2.msra.mxu0 0.0
  %588 = vmatprep.subr.mxu0 0.0
  %589 = vmatpush2.msra.mxu0 0.0
  %590 = vmatprep.subr.mxu0 0.0
  %591 = vmatpush2.msra.mxu0 0.0
  %592 = vmatprep.mubr.f32.mxu0 0.0
  %593 = vmatmul.mubr.f32.gmra.mxu0 %v526
  %v594 = vpop.f32.mrf.mxu0
  %v595 = vadd.f32 0.0, %v594
  %v596 = vpop.f32.mrf.mxu0
  %597 = vdwg.mxu0
  %v598 = vxor.u32 %v595, 2147483648
  %v599 = vmul.f32 %v598, 1.442695
  %v600 = vpow.pop %v599
  %v601 = vadd.f32 %v600, 1.0
  %v602 = vrcp.pop %v601
  %v603 = vmul.f32 1.0, %v602
  %v604 = vtanh.pop %v595
  %v605 = vmul.f32 %v603, %v392
  %607 = vrot.lane.b32.xlu0 %v604, 64
  %v608 = vpop.permute.xlu0 %607
  %v610 = vmul.f32 %v603, %v608
  %612 = vrot.lane.b32.xlu0 %v610, 32
  %v613 = vpop.permute.xlu0 %612
  %v615 = vadd.f32 %v605, %v613
  %v616 = vtanh.pop %v615
  %618 = vrot.lane.b32.xlu0 %v616, 64
  %v619 = vpop.permute.xlu0 %618
  %v621 = vmul.f32 %v603, %v619
  %623 = vrot.lane.b32.xlu0 %v621, 64
  %v624 = vpop.permute.xlu0 %623
  %627 = vrot.lane.b32.xlu0 %v505, 32
  %v628 = vpop.permute.xlu0 %627
  %631 = vrot.lane.b32.xlu0 %v615, 64
  %v632 = vpop.permute.xlu0 %631
  %v634 = vsel %vm145, %v514, %v624
  %v635 = vsel %vm395, %v634, %v628
  %v636 = vsel %vm413, %v635, %v632
  %637 = vst [vmem:[%s9] sm:$0x3] %v636
  // Predicated region
  $region42: #{show_attend_tell_core.1} parent=0 // pred_check
    _
  $region43: #{show_attend_tell_core.1} parent=0 // pred_check_branch
    %639 = sbr.rel (0) target = $region45
  $region44: #{show_attend_tell_core.1} parent=0 // pred_region
    _
  $region45: #{show_attend_tell_core.1} parent=0 // pred_fallthru
    _
  // Predicated region
  $region46: #{show_attend_tell_core.1} parent=0 // pred_check
    _
  $region47: #{show_attend_tell_core.1} parent=0 // pred_check_branch
    %641 = sbr.rel (0) target = $region49
  $region48: #{show_attend_tell_core.1} parent=0 // pred_region
    _
  $region49: #{show_attend_tell_core.1} parent=0 // pred_fallthru
    _

</llo_original>
